<compile_context>
chip_gen: v5e
topology: v5e:2x2
jax: 0.10.0
libtpu: 0.0.40
codegen_flags: <defaults>
</compile_context>

<pallas_src>
import functools

import jax
import jax.numpy as jnp
from jax.experimental import pallas as pl
from jax.experimental.pallas import tpu as pltpu


# ---------------------------------------------------------------------------
# ROIAlign (single FPN level) as dense interpolation-matrix matmuls.
#
# Bilinear sampling is separable, so for each ROI we build 1-D interpolation
# matrices A_y [ph, H] and A_x [pw, W] (already averaged over the
# sampling_ratio sub-samples per bin, with the "outside" mask folded in) and
# compute pooled = A_y @ feat @ A_x^T per channel. This matches the
# maskrcnn_benchmark ROIAlign CUDA op numerically.
#
# TODO(synk): multi-level FPN level assignment (LevelMapper) is not
#   implemented; this synthetic setup uses a single pooling scale.
# TODO(synk): at realistic ROI counts (R ~ 1000) `features[batch_idx]`
#   materializes R copies of the feature map and the per-ROI einsums pad to
#   tiny (8,128) tiles; the right fix is fusing ROIAlign into the Pallas
#   kernel (scalar-prefetched box/batch tables + manual DMA of the per-ROI
#   window). Left in XLA for this synthetic single-level config.
# ---------------------------------------------------------------------------
def _interp_matrix(starts, bin_sizes, P, sr, L):
    """Averaged 1-D bilinear interpolation matrices.

    starts:    [R] ROI start coordinate (already scaled to feature coords)
    bin_sizes: [R] bin size along this axis
    Returns [R, P, L] with row p = mean over the sr sub-samples of bin p.
    """
    p = jnp.arange(P, dtype=jnp.float32)
    i = jnp.arange(sr, dtype=jnp.float32)
    # sample coordinates: [R, P, sr]
    coords = (starts[:, None, None]
              + p[None, :, None] * bin_sizes[:, None, None]
              + (i[None, None, :] + 0.5) * bin_sizes[:, None, None] / sr)
    inside = (coords >= -1.0) & (coords <= L)
    c = jnp.maximum(coords, 0.0)
    low = jnp.minimum(jnp.floor(c).astype(jnp.int32), L - 1)
    high = jnp.minimum(low + 1, L - 1)
    c = jnp.where(low >= L - 1, low.astype(c.dtype), c)
    lw = c - low.astype(c.dtype)     # weight on `high`
    hw = 1.0 - lw                    # weight on `low`
    grid = jnp.arange(L, dtype=jnp.int32)
    w = (hw[..., None] * (low[..., None] == grid)
         + lw[..., None] * (high[..., None] == grid))    # [R, P, sr, L]
    w = w * inside[..., None]
    return w.mean(axis=2)                                # [R, P, L]


def roi_align(features, rois, output_size, spatial_scale, sampling_ratio):
    """features: [N, C, H, W]; rois: [R, 5] = (batch_idx, x1, y1, x2, y2).

    Returns [R, C, out_h, out_w].
    """
    N, C, H, W = features.shape
    ph, pw = output_size
    sr = sampling_ratio

    batch_idx = rois[:, 0].astype(jnp.int32)
    x1 = rois[:, 1] * spatial_scale
    y1 = rois[:, 2] * spatial_scale
    x2 = rois[:, 3] * spatial_scale
    y2 = rois[:, 4] * spatial_scale
    roi_w = jnp.maximum(x2 - x1, 1.0)
    roi_h = jnp.maximum(y2 - y1, 1.0)
    bin_w = roi_w / pw
    bin_h = roi_h / ph

    Ay = _interp_matrix(y1, bin_h, ph, sr, H)   # [R, ph, H]
    Ax = _interp_matrix(x1, bin_w, pw, sr, W)   # [R, pw, W]

    feat = features[batch_idx]                  # [R, C, H, W]
    tmp = jnp.einsum("rph,rchw->rcpw", Ay, feat)
    pooled = jnp.einsum("rcpw,rqw->rcpq", tmp, Ax)
    return pooled                               # [R, C, ph, pw]


# ---------------------------------------------------------------------------
# Pallas kernel: fused fc6 -> ReLU -> fc7 -> ReLU (the MLP head hot path).
# Grid = (row tiles ["parallel"], K tiles ["arbitrary"]).
# ---------------------------------------------------------------------------
def _mlp_head_kernel(x_ref, w6_ref, b6_ref, w7_ref, b7_ref, o_ref, acc_ref):
    # bf16 operands on the MXU; f32 accumulation / bias / ReLU.
    # All ops are row-independent -> ragged-last-row-tile masking is safe.
    k = pl.program_id(1)

    @pl.when(k == 0)
    def _():
        acc_ref[...] = jnp.zeros_like(acc_ref)

    acc_ref[...] += jnp.dot(x_ref[...], w6_ref[...],
                            preferred_element_type=jnp.float32)

    @pl.when(k == pl.num_programs(1) - 1)
    def _():
        h = jnp.maximum(acc_ref[...] + b6_ref[...], 0.0)
        h2 = jnp.dot(h.astype(w7_ref.dtype), w7_ref[...],
                     preferred_element_type=jnp.float32)
        o_ref[...] = jnp.maximum(h2 + b7_ref[...], 0.0).astype(o_ref.dtype)


def _round_up(x, m):
    return ((x + m - 1) // m) * m


def _num_tensorcores():
    """Best-effort TensorCores-per-chip count (for 'parallel' grid sharding)."""
    try:
        kind = jax.devices()[0].device_kind.lower()
    except Exception:  # pragma: no cover
        return 1
    # 2 TCs per chip/device: v4 / v5p (megacore) and v7x. v5e/v6e have 1.
    if any(t in kind for t in ("v4", "v5p", "v7", "7x")):
        return 2
    return 1


def _choose_tile_rows(R, num_tc, max_tile=2048):
    """Row-tile size for the MLP head.

    1-TC chips (v5e/v6e): fewest grid steps under `max_tile` — the grid is a
    serial loop there, extra steps are pure ~0.35us/step overhead.
    2-TC chips (v4/v5p/v7x): a multiple-of-num_tc, equally sized split so both
    TensorCores get balanced work via the 'parallel' row axis.
    """
    r8 = _round_up(max(R, 1), 8)
    if num_tc <= 1 or r8 <= 8 * num_tc:
        steps = pl.cdiv(r8, max_tile)
    else:
        steps = _round_up(max(num_tc, pl.cdiv(r8, max_tile)), num_tc)
    return min(r8, _round_up(pl.cdiv(r8, steps), 8))


def _choose_tile_k(D, hid_p, max_weight_bytes=4 << 20, max_tk=2048):
    """K tile so the double-buffered bf16 fc6-weight tile stays inside VMEM.

    Only kicks in at production FPN sizes (e.g. D=12544, hid=1024). tk must be
    a multiple of 128 (lane-dense x blocks, 8-aligned w6 blocks) that divides
    D exactly, so the reduction never reads a ragged (garbage-padded) K tile.
    """
    if D * hid_p * 2 <= max_weight_bytes:
        return D
    upper = (min(max_tk, D) // 128) * 128
    for cand in range(upper, 0, -128):
        if D % cand == 0:
            return cand
    return D  # no suitable divisor: keep full K resident (correct, more VMEM)


def mlp_head(x, w6, b6, w7, b7, *, out_dtype=jnp.bfloat16, max_tile_rows=2048):
    """x: [R, D]; w6: [D, H]; b6: [H]; w7: [H, P]; b7: [P] -> [R, P].

    relu(relu(x @ w6 + b6) @ w7 + b7), fused in one Pallas kernel with the
    hidden/output dims zero-padded to lane width 128.
    """
    R, D = x.shape
    hid = w6.shape[1]
    rep = w7.shape[1]
    if R == 0:  # no proposals -> avoid a zero-sized grid
        return jnp.zeros((0, rep), out_dtype)

    hid_p = _round_up(hid, 128)
    rep_p = _round_up(rep, 128)

    # bf16 MXU operands. x is expected to arrive already in bf16 (cast fused
    # into the producer by the caller); astype is a no-op in that case.
    x = x.astype(jnp.bfloat16)
    w6p = jnp.pad(w6.astype(jnp.bfloat16), ((0, 0), (0, hid_p - hid)))
    w7p = jnp.pad(w7.astype(jnp.bfloat16),
                  ((0, hid_p - hid), (0, rep_p - rep)))
    b6p = jnp.pad(b6.astype(jnp.float32), (0, hid_p - hid)).reshape(1, hid_p)
    b7p = jnp.pad(b7.astype(jnp.float32), (0, rep_p - rep)).reshape(1, rep_p)

    num_tc = _num_tensorcores()
    tile_rows = _choose_tile_rows(R, num_tc, max_tile_rows)
    tile_k = _choose_tile_k(D, hid_p)
    grid = (pl.cdiv(R, tile_rows), pl.cdiv(D, tile_k))

    out_p = pl.pallas_call(
        _mlp_head_kernel,
        out_shape=jax.ShapeDtypeStruct((R, rep_p), out_dtype),
        grid=grid,
        in_specs=[
            pl.BlockSpec((tile_rows, tile_k), lambda i, k: (i, k)),
            pl.BlockSpec((tile_k, hid_p), lambda i, k: (k, 0)),
            pl.BlockSpec((1, hid_p), lambda i, k: (0, 0)),
            pl.BlockSpec((hid_p, rep_p), lambda i, k: (0, 0)),
            pl.BlockSpec((1, rep_p), lambda i, k: (0, 0)),
        ],
        out_specs=pl.BlockSpec((tile_rows, rep_p), lambda i, k: (i, 0)),
        scratch_shapes=[pltpu.VMEM((tile_rows, hid_p), jnp.float32)],
        compiler_params=pltpu.CompilerParams(
            dimension_semantics=("parallel", "arbitrary"),
        ),
    )(x, w6p, b6p, w7p, b7p)

    return out_p[:, :rep]   # drop the lane padding


# ---------------------------------------------------------------------------
# Module wrapper: FPN2MLPFeatureExtractor.forward
# ---------------------------------------------------------------------------
@functools.partial(jax.jit, static_argnames=("resolution", "scale", "sampling_ratio"))
def _fpn2mlp_forward(features, rois, w6, b6, w7, b7, *,
                     resolution, scale, sampling_ratio):
    pooled = roi_align(features, rois, (resolution, resolution),
                       scale, sampling_ratio)          # [R, C, res, res]
    # x.view(x.size(0), -1); cast to bf16 here so XLA fuses the convert into
    # the roi_align einsum epilogue (no standalone HBM pass over x).
    flat = pooled.reshape(pooled.shape[0], -1).astype(jnp.bfloat16)
    # no box_norm under the default (layer-wise norm) config
    return mlp_head(flat, w6, b6, w7, b7)


class FPN2MLPFeatureExtractor:
    def __init__(self, out_channels=4, resolution=4, scale=0.25,
                 sampling_ratio=2, representation_size=32, key=None):
        self.resolution = resolution
        self.scale = scale
        self.sampling_ratio = sampling_ratio
        input_size = out_channels * resolution ** 2
        if key is None:
            key = jax.random.PRNGKey(0)
        k6w, k6b, k7w, k7b = jax.random.split(key, 4)
        # nn.Linear weights stored as [in, out] (y = x @ W + b), equivalent to
        # PyTorch's x @ W.T + b with W of shape [out, in].
        self.w6 = (jax.random.normal(k6w, (input_size, representation_size),
                                     jnp.float32) * (1.0 / input_size) ** 0.5)
        self.b6 = jax.random.normal(k6b, (representation_size,), jnp.float32) * 0.01
        self.w7 = (jax.random.normal(k7w, (representation_size, representation_size),
                                     jnp.float32) * (1.0 / representation_size) ** 0.5)
        self.b7 = jax.random.normal(k7b, (representation_size,), jnp.float32) * 0.01

    def __call__(self, features, rois):
        # features: [N, C, H, W]; rois: [R, 5] = (batch_idx, x1, y1, x2, y2)
        return _fpn2mlp_forward(
            features, rois, self.w6, self.b6, self.w7, self.b7,
            resolution=self.resolution, scale=self.scale,
            sampling_ratio=self.sampling_ratio)


if __name__ == "__main__":
    key = jax.random.PRNGKey(0)
    k_feat, k_params = jax.random.split(key)

    N, C, H, W = 2, 4, 16, 16
    features = jax.random.normal(k_feat, (N, C, H, W), jnp.float32)

    # (batch_idx, x1, y1, x2, y2) in image coords; image is 64x64 (scale 0.25).
    rois = jnp.array(
        [
            [0.0, 4.0, 4.0, 40.0, 40.0],
            [0.0, 0.0, 0.0, 20.0, 28.0],
            [0.0, 10.0, 6.0, 50.0, 60.0],
            [0.0, 8.0, 8.0, 30.0, 30.0],
            [1.0, 2.0, 3.0, 45.0, 33.0],
            [1.0, 16.0, 16.0, 60.0, 60.0],
            [1.0, 5.0, 20.0, 25.0, 44.0],
            [1.0, 0.0, 0.0, 63.0, 63.0],
        ],
        dtype=jnp.float32,
    )

    extractor = FPN2MLPFeatureExtractor(
        out_channels=C, resolution=4, scale=0.25, sampling_ratio=2,
        representation_size=32, key=k_params,
    )

    out = extractor(features, rois)
    out = jax.block_until_ready(out)
    assert out.shape == (rois.shape[0], 32)
    assert bool(jnp.all(out >= 0.0))  # final ReLU

    # Pure-JAX f32 reference (loose tolerance: kernel matmuls/output run in bf16).
    pooled_ref = roi_align(features, rois, (4, 4), 0.25, 2)
    flat_ref = pooled_ref.reshape(pooled_ref.shape[0], -1)
    ref = jnp.maximum(flat_ref @ extractor.w6 + extractor.b6, 0.0)
    ref = jnp.maximum(ref @ extractor.w7 + extractor.b7, 0.0)
    err = float(jnp.max(jnp.abs(out.astype(jnp.float32) - ref)))
    assert err < 1e-1, err

    print("KERNEL_OK")
</pallas_src>

<mosaic_0001>
module attributes {stable_mosaic.version = 11 : i64} {
  func.func @_mlp_head_kernel(%arg0: i32, %arg1: i32, %arg2: memref<8x64xbf16, #tpu.memory_space<vmem>>, %arg3: memref<64x128xbf16, #tpu.memory_space<vmem>>, %arg4: memref<1x128xf32, #tpu.memory_space<vmem>>, %arg5: memref<128x128xbf16, #tpu.memory_space<vmem>>, %arg6: memref<1x128xf32, #tpu.memory_space<vmem>>, %arg7: memref<8x128xbf16, #tpu.memory_space<vmem>>, %arg8: memref<8x128xf32, #tpu.memory_space<vmem>>) attributes {dimension_semantics = [#tpu.dimension_semantics<parallel>, #tpu.dimension_semantics<arbitrary>], iteration_bounds = array<i64: 1, 1>, scalar_prefetch = 0 : i64, scratch_operands = 1 : i64, tpu.core_type = #tpu.core_type<tc>, window_params = [{transform_indices = @transform_0, window_bounds = array<i64: 8, 64>}, {transform_indices = @transform_1, window_bounds = array<i64: 64, 128>}, {pipeline_mode = #tpu.pipeline_mode<synchronous>, transform_indices = @transform_2, window_bounds = array<i64: 1, 128>}, {pipeline_mode = #tpu.pipeline_mode<synchronous>, transform_indices = @transform_3, window_bounds = array<i64: 128, 128>}, {pipeline_mode = #tpu.pipeline_mode<synchronous>, transform_indices = @transform_4, window_bounds = array<i64: 1, 128>}, {transform_indices = @transform_5, window_bounds = array<i64: 8, 128>}]} {
    %c0_i32 = arith.constant 0 : i32
    %0 = arith.cmpi eq, %arg1, %c0_i32 : i32
    %1 = arith.extui %0 : i1 to i32
    %c0_i32_0 = arith.constant 0 : i32
    %2 = arith.cmpi ne, %1, %c0_i32_0 : i32
    scf.if %2 {
      %cst_10 = arith.constant 0.000000e+00 : f32
      %12 = vector.broadcast %cst_10 : f32 to vector<8x128xf32>
      %c0_11 = arith.constant 0 : index
      %c0_12 = arith.constant 0 : index
      %13 = vector.load %arg8[%c0_11, %c0_12] : memref<8x128xf32, #tpu.memory_space<vmem>>, vector<8x128xf32>
      tpu.vector_store %arg8[%c0_11, %c0_12], %12 {strides = array<i32>} : memref<8x128xf32, #tpu.memory_space<vmem>>, vector<8x128xf32>,
    } else {
    }
    %c0 = arith.constant 0 : index
    %c0_1 = arith.constant 0 : index
    %3 = vector.load %arg8[%c0, %c0_1] : memref<8x128xf32, #tpu.memory_space<vmem>>, vector<8x128xf32>
    %c0_2 = arith.constant 0 : index
    %c0_3 = arith.constant 0 : index
    %4 = vector.load %arg2[%c0_2, %c0_3] : memref<8x64xbf16, #tpu.memory_space<vmem>>, vector<8x64xbf16>
    %c0_4 = arith.constant 0 : index
    %c0_5 = arith.constant 0 : index
    %5 = vector.load %arg3[%c0_4, %c0_5] : memref<64x128xbf16, #tpu.memory_space<vmem>>, vector<64x128xbf16>
    %cst = arith.constant dense<0.000000e+00> : vector<8x128xf32>
    %6 = tpu.matmul %4, %5, %cst {dimension_numbers = #tpu.dot_dimension_numbers<[1], [0], [0], [1], [0, 0, 1, 1], [], []>} : vector<8x64xbf16>, vector<64x128xbf16>, vector<8x128xf32> -> vector<8x128xf32>
    %7 = arith.addf %3, %6 : vector<8x128xf32>
    %c0_6 = arith.constant 0 : index
    %c0_7 = arith.constant 0 : index
    %8 = vector.load %arg8[%c0_6, %c0_7] : memref<8x128xf32, #tpu.memory_space<vmem>>, vector<8x128xf32>
    tpu.vector_store %arg8[%c0_6, %c0_7], %7 {strides = array<i32>} : memref<8x128xf32, #tpu.memory_space<vmem>>, vector<8x128xf32>,
    %c0_i32_8 = arith.constant 0 : i32
    %9 = arith.cmpi eq, %arg1, %c0_i32_8 : i32
    %10 = arith.extui %9 : i1 to i32
    %c0_i32_9 = arith.constant 0 : i32
    %11 = arith.cmpi ne, %10, %c0_i32_9 : i32
    scf.if %11 {
      %c0_10 = arith.constant 0 : index
      %c0_11 = arith.constant 0 : index
      %12 = vector.load %arg8[%c0_10, %c0_11] : memref<8x128xf32, #tpu.memory_space<vmem>>, vector<8x128xf32>
      %c0_12 = arith.constant 0 : index
      %c0_13 = arith.constant 0 : index
      %13 = vector.load %arg4[%c0_12, %c0_13] : memref<1x128xf32, #tpu.memory_space<vmem>>, vector<1x128xf32>
      %14 = vector.broadcast %13 : vector<1x128xf32> to vector<8x128xf32>
      %15 = arith.addf %12, %14 : vector<8x128xf32>
      %cst_14 = arith.constant 0.000000e+00 : f32
      %16 = vector.broadcast %cst_14 : f32 to vector<8x128xf32>
      %17 = arith.maximumf %15, %16 : vector<8x128xf32>
      %18 = arith.truncf %17 : vector<8x128xf32> to vector<8x128xbf16>
      %c0_15 = arith.constant 0 : index
      %c0_16 = arith.constant 0 : index
      %19 = vector.load %arg5[%c0_15, %c0_16] : memref<128x128xbf16, #tpu.memory_space<vmem>>, vector<128x128xbf16>
      %cst_17 = arith.constant dense<0.000000e+00> : vector<8x128xf32>
      %20 = tpu.matmul %18, %19, %cst_17 {dimension_numbers = #tpu.dot_dimension_numbers<[1], [0], [0], [1], [0, 0, 1, 1], [], []>} : vector<8x128xbf16>, vector<128x128xbf16>, vector<8x128xf32> -> vector<8x128xf32>
      %c0_18 = arith.constant 0 : index
      %c0_19 = arith.constant 0 : index
      %21 = vector.load %arg6[%c0_18, %c0_19] : memref<1x128xf32, #tpu.memory_space<vmem>>, vector<1x128xf32>
      %22 = vector.broadcast %21 : vector<1x128xf32> to vector<8x128xf32>
      %23 = arith.addf %20, %22 : vector<8x128xf32>
      %cst_20 = arith.constant 0.000000e+00 : f32
      %24 = vector.broadcast %cst_20 : f32 to vector<8x128xf32>
      %25 = arith.maximumf %23, %24 : vector<8x128xf32>
      %26 = arith.truncf %25 : vector<8x128xf32> to vector<8x128xbf16>
      %c0_21 = arith.constant 0 : index
      %c0_22 = arith.constant 0 : index
      %27 = vector.load %arg7[%c0_21, %c0_22] : memref<8x128xbf16, #tpu.memory_space<vmem>>, vector<8x128xbf16>
      tpu.vector_store %arg7[%c0_21, %c0_22], %26 {strides = array<i32>} : memref<8x128xbf16, #tpu.memory_space<vmem>>, vector<8x128xbf16>,
    } else {
    }
    return
  }
  func.func @transform_0(%arg0: i32, %arg1: i32) -> (i32, i32) {
    %c0_i32 = arith.constant 0 : i32
    return %arg0, %arg1 : i32, i32
  }
  func.func @transform_1(%arg0: i32, %arg1: i32) -> (i32, i32) {
    %c0_i32 = arith.constant 0 : i32
    %c0_i32_0 = arith.constant 0 : i32
    return %arg1, %c0_i32 : i32, i32
  }
  func.func @transform_2(%arg0: i32, %arg1: i32) -> (i32, i32) {
    %c0_i32 = arith.constant 0 : i32
    %c0_i32_0 = arith.constant 0 : i32
    %c0_i32_1 = arith.constant 0 : i32
    return %c0_i32, %c0_i32_0 : i32, i32
  }
  func.func @transform_3(%arg0: i32, %arg1: i32) -> (i32, i32) {
    %c0_i32 = arith.constant 0 : i32
    %c0_i32_0 = arith.constant 0 : i32
    %c0_i32_1 = arith.constant 0 : i32
    return %c0_i32, %c0_i32_0 : i32, i32
  }
  func.func @transform_4(%arg0: i32, %arg1: i32) -> (i32, i32) {
    %c0_i32 = arith.constant 0 : i32
    %c0_i32_0 = arith.constant 0 : i32
    %c0_i32_1 = arith.constant 0 : i32
    return %c0_i32, %c0_i32_0 : i32, i32
  }
  func.func @transform_5(%arg0: i32, %arg1: i32) -> (i32, i32) {
    %c0_i32 = arith.constant 0 : i32
    %c0_i32_0 = arith.constant 0 : i32
    return %arg0, %c0_i32 : i32, i32
  }
}

</mosaic_0001>

<llo_original>
// kernel: _fpn2mlp_forward.1
$region0: #{_fpn2mlp_forward.1}
  #allocation0 [shape = 'u32[]', space=smem, size = 0x4, offset = 0x4, fixed_abs, tag = 'smem constant byte address 0x4 - core index']
  #allocation1 [shape = 'u32[72,128]{1,0:T(1,128)}', space=vmem, size = 0x9000, scoped, tag = 'internal scratch']
  #allocation2 [shape = 'f32[8,128]{1,0:T(8,128)}', space=vmem, size = 0x1000, scoped, tag = 'scratch operand']
  %s0 = inlined_call_operand.vmem [shape: bf16[8,64], index: 0, kind: input, shape index: {}]
  %s1 = inlined_call_operand.vmem [shape: bf16[64,128], index: 1, kind: input, shape index: {}]
  %s2 = inlined_call_operand.vmem [shape: f32[1,128], index: 2, kind: input, shape index: {}]
  %s3 = inlined_call_operand.vmem [shape: bf16[128,128], index: 3, kind: input, shape index: {}]
  %s4 = inlined_call_operand.vmem [shape: f32[1,128], index: 4, kind: input, shape index: {}]
  %s5 = inlined_call_operand.hbm [shape: bf16[8,128], index: 5, kind: output, shape index: {}]
  %s6 = sld [smem:[#allocation0]]
  $region38: #{_fpn2mlp_forward.1} parent=0
    _
  %s8 = ssub.s32 1, %s6
  %s9 = scalar_select 0, %s8, %s6
  $region1: #{_fpn2mlp_forward.1} parent=0
    #allocation3 [shape = 'u8[2048]{0}', space=vmem, size = 0x800, scoped, tag = 'output window, operand 0, single buffered']
    #allocation4 [shape = 's32[1]{0}', space=sflag, size = 0x4, scoped, tag = 'scoped memory for _fpn2mlp_forward.1']
    %10 = vsyncpa [#allocation4], 0
    // Predicated region
    $region2: #{_fpn2mlp_forward.1} parent=1 // pred_check
      _
    $region3: #{_fpn2mlp_forward.1} parent=1 // pred_check_branch
      %12 = sbr.rel (0) target = $region5
    $region4: #{_fpn2mlp_forward.1} parent=1 // pred_region
      _
    $region5: #{_fpn2mlp_forward.1} parent=1 // pred_fallthru
      _
    // Predicated region
    $region6: #{_fpn2mlp_forward.1} parent=1 // pred_check
      _
    $region7: #{_fpn2mlp_forward.1} parent=1 // pred_check_branch
      %14 = sbr.rel (0) target = $region9
    $region8: #{_fpn2mlp_forward.1} parent=1 // pred_region
      _
    $region9: #{_fpn2mlp_forward.1} parent=1 // pred_fallthru
      _
    // Predicated region
    $region10: #{_fpn2mlp_forward.1} parent=1 // pred_check
      _
    $region11: #{_fpn2mlp_forward.1} parent=1 // pred_check_branch
      %16 = sbr.rel (0) target = $region13
    $region12: #{_fpn2mlp_forward.1} parent=1 // pred_region
      _
    $region13: #{_fpn2mlp_forward.1} parent=1 // pred_fallthru
      _
    // Predicated region
    $region14: #{_fpn2mlp_forward.1} parent=1 // pred_check
      _
    $region15: #{_fpn2mlp_forward.1} parent=1 // pred_check_branch
      %18 = sbr.rel (0) target = $region17
    $region16: #{_fpn2mlp_forward.1} parent=1 // pred_region
      _
    $region17: #{_fpn2mlp_forward.1} parent=1 // pred_fallthru
      _
    // Predicated region
    $region18: #{_fpn2mlp_forward.1} parent=1 // pred_check
      _
    $region19: #{_fpn2mlp_forward.1} parent=1 // pred_check_branch
      %20 = sbr.rel (0) target = $region21
    $region20: #{_fpn2mlp_forward.1} parent=1 // pred_region
      _
    $region21: #{_fpn2mlp_forward.1} parent=1 // pred_fallthru
      _
    %p22 = scmp.eq.s32.totalorder 0, 0
    // Predicated region
    $region22: #{_fpn2mlp_forward.1} parent=1 // pred_check
      %p23 = pneg %p22
    $region23: #{_fpn2mlp_forward.1} parent=1 // pred_check_branch
      %25 = sbr.rel (%p23) target = $region25
    $region24: #{_fpn2mlp_forward.1} parent=1 // pred_region
      %26 = vst [vmem:[#allocation2] sm:$0xff] 0.0
    $region25: #{_fpn2mlp_forward.1} parent=1 // pred_fallthru
      _
    %v27 = vld [vmem:[#allocation2] sm:$0xff]
    %v28 = vld [vmem:[%s0] sm:$0xf]
    %v29 = vld [vmem:[%s1] sm:$0xf]
    %v30 = vld [vmem:[%s1 + $0x4] sm:$0xf]
    %v31 = vld [vmem:[%s1 + $0x8] sm:$0xf]
    %v32 = vld [vmem:[%s1 + $0xc] sm:$0xf]
    %v33 = vld [vmem:[%s1 + $0x10] sm:$0xf]
    %v34 = vld [vmem:[%s1 + $0x14] sm:$0xf]
    %v35 = vld [vmem:[%s1 + $0x18] sm:$0xf]
    %v36 = vld [vmem:[%s1 + $0x1c] sm:$0xf]
    %v45 = vunpack.c.l.b16 %v29
    %v46 = vunpack.c.l.b16 %v30
    %v47 = vunpack.c.l.b16 %v31
    %v48 = vunpack.c.l.b16 %v32
    %v49 = vunpack.c.l.b16 %v33
    %v50 = vunpack.c.l.b16 %v34
    %v51 = vunpack.c.l.b16 %v35
    %v52 = vunpack.c.l.b16 %v36
    %v53 = vpack.c.b16 %v46, %v45
    %v54 = vpack.c.b16 %v48, %v47
    %v55 = vpack.c.b16 %v50, %v49
    %v56 = vpack.c.b16 %v52, %v51
    %vm61 = vcmask 523264
    %v63 = vsel %vm61, %v28, 0
    %65 = vmatpush.bf16.msra.mxu0 0
    %66 = vmatpush.bf16.msra.mxu0 0
    %67 = vmatpush.bf16.msra.mxu0 0
    %68 = vmatpush.bf16.msra.mxu0 0
    %69 = vmatpush.bf16.msra.mxu0 %v56
    %70 = vmatpush.bf16.msra.mxu0 %v55
    %71 = vmatpush.bf16.msra.mxu0 %v54
    %72 = vmatpush.bf16.msra.mxu0 %v53
    %73 = vmatmul.bf16.gmra.mxu0 %v63
    %v74 = vpop.f32.mrf.mxu0
    %v75 = vadd.f32 0.0, %v74
    %v76 = vpop.f32.mrf.mxu0
    %77 = vdwg.mxu0
    %v78 = vadd.f32 %v27, %v75
    %79 = vst [vmem:[#allocation2] sm:$0xff] %v78
    // Predicated region
    $region26: #{_fpn2mlp_forward.1} parent=1 // pred_check
      %p80 = pneg %p22
    $region27: #{_fpn2mlp_forward.1} parent=1 // pred_check_branch
      %82 = sbr.rel (%p80) target = $region29
    $region28: #{_fpn2mlp_forward.1} parent=1 // pred_region
      %v83 = vld [vmem:[#allocation2] sm:$0xff]
      %v84 = vld [vmem:[%s2] sm:$0x1]
      %v86 = vperm.slane %v84, 0
      %v88 = vadd.f32 %v83, %v86
      %v89 = vmax.f32 %v88, 0.0
      %v90 = vpack.c.bf16 %v89, %v89
      %v91 = vld [vmem:[%s3] sm:$0xf]
      %v92 = vld [vmem:[%s3 + $0x4] sm:$0xf]
      %v93 = vld [vmem:[%s3 + $0x8] sm:$0xf]
      %v94 = vld [vmem:[%s3 + $0xc] sm:$0xf]
      %v95 = vld [vmem:[%s3 + $0x10] sm:$0xf]
      %v96 = vld [vmem:[%s3 + $0x14] sm:$0xf]
      %v97 = vld [vmem:[%s3 + $0x18] sm:$0xf]
      %v98 = vld [vmem:[%s3 + $0x1c] sm:$0xf]
      %v99 = vld [vmem:[%s3 + $0x20] sm:$0xf]
      %v100 = vld [vmem:[%s3 + $0x24] sm:$0xf]
      %v101 = vld [vmem:[%s3 + $0x28] sm:$0xf]
      %v102 = vld [vmem:[%s3 + $0x2c] sm:$0xf]
      %v103 = vld [vmem:[%s3 + $0x30] sm:$0xf]
      %v104 = vld [vmem:[%s3 + $0x34] sm:$0xf]
      %v105 = vld [vmem:[%s3 + $0x38] sm:$0xf]
      %v106 = vld [vmem:[%s3 + $0x3c] sm:$0xf]
      %v107 = vld [vmem:[%s4] sm:$0x1]
      %v109 = vperm.slane %v107, 0
      %v127 = vunpack.c.l.b16 %v91
      %v128 = vunpack.c.l.b16 %v92
      %v129 = vunpack.c.l.b16 %v93
      %v130 = vunpack.c.l.b16 %v94
      %v131 = vunpack.c.l.b16 %v95
      %v132 = vunpack.c.l.b16 %v96
      %v133 = vunpack.c.l.b16 %v97
      %v134 = vunpack.c.l.b16 %v98
      %v135 = vunpack.c.l.b16 %v99
      %v136 = vunpack.c.l.b16 %v100
      %v137 = vunpack.c.l.b16 %v101
      %v138 = vunpack.c.l.b16 %v102
      %v139 = vunpack.c.l.b16 %v103
      %v140 = vunpack.c.l.b16 %v104
      %v141 = vunpack.c.l.b16 %v105
      %v142 = vunpack.c.l.b16 %v106
      %v143 = vpack.c.b16 %v128, %v127
      %v144 = vpack.c.b16 %v130, %v129
      %v145 = vpack.c.b16 %v132, %v131
      %v146 = vpack.c.b16 %v134, %v133
      %v147 = vpack.c.b16 %v136, %v135
      %v148 = vpack.c.b16 %v138, %v137
      %v149 = vpack.c.b16 %v140, %v139
      %v150 = vpack.c.b16 %v142, %v141
      %159 = vmatpush.bf16.msra.mxu0 %v150
      %160 = vmatpush.bf16.msra.mxu0 %v149
      %161 = vmatpush.bf16.msra.mxu0 %v148
      %162 = vmatpush.bf16.msra.mxu0 %v147
      %163 = vmatpush.bf16.msra.mxu0 %v146
      %164 = vmatpush.bf16.msra.mxu0 %v145
      %165 = vmatpush.bf16.msra.mxu0 %v144
      %166 = vmatpush.bf16.msra.mxu0 %v143
      %167 = vmatmul.bf16.gmra.mxu0 %v90
      %v168 = vpop.f32.mrf.mxu0
      %v169 = vadd.f32 %v109, %v168
      %v170 = vpop.f32.mrf.mxu0
      %171 = vdwg.mxu0
      %v172 = vmax.f32 %v169, 0.0
      %v173 = vpack.c.bf16 %v172, %v172
      %174 = vst [vmem:[#allocation3] sm:$0xf] %v173
    $region29: #{_fpn2mlp_forward.1} parent=1 // pred_fallthru
      _
    // Predicated region
    $region30: #{_fpn2mlp_forward.1} parent=1 // pred_check
      _
    $region31: #{_fpn2mlp_forward.1} parent=1 // pred_check_branch
      %176 = sbr.rel (0) target = $region33
    $region32: #{_fpn2mlp_forward.1} parent=1 // pred_region
      %178 = vsyncadd [#allocation4], 0
      %s180 = sshll.u32 [#allocation3], 4
      %s181 = int_to_ptr.vmem [resolvable:$true] %s180
      %s182 = sshll.u32 %s5, 4
      %s183 = int_to_ptr.hbm [resolvable:$true] %s182
      %185 = dma.vmem_to_hbm [thread:$0]  %s181, 64, %s183, [#allocation4]
    $region33: #{_fpn2mlp_forward.1} parent=1 // pred_fallthru
      _
    // Predicated region
    $region34: #{_fpn2mlp_forward.1} parent=1 // pred_check
      _
    $region35: #{_fpn2mlp_forward.1} parent=1 // pred_check_branch
      %187 = sbr.rel (0) target = $region37
    $region36: #{_fpn2mlp_forward.1} parent=1 // pred_region
      %189 = dma.done [#allocation4], 64
    $region37: #{_fpn2mlp_forward.1} parent=1 // pred_fallthru
      _
    %190 = vsyncpa [#allocation4], 1

</llo_original>
